<compile_context>
chip_gen: v5e
topology: v5e:2x2
jax: 0.10.0
libtpu: 0.0.40
codegen_flags: <defaults>
</compile_context>

<pallas_src>
import jax
import jax.numpy as jnp
from jax.experimental import pallas as pl
from jax.experimental.pallas import tpu as pltpu


def _round_up(x, m):
    return (x + m - 1) // m * m


def _round_down(x, m):
    return (x // m) * m


def _cdiv(a, b):
    return (a + b - 1) // b


def _vmem_budget_and_cores():
    """Returns (usable VMEM request cap in bytes, is_multi_tensorcore_chip)."""
    cap = None
    try:
        cap = int(pltpu.get_tpu_info().vmem_capacity_bytes)
    except Exception:
        cap = None
    if not cap or cap <= 0:
        cap = 64 << 20  # conservative fallback (v7x-sized)

    kind = ""
    try:
        kind = jax.devices()[0].device_kind.lower()
    except Exception:
        pass
    is_v7 = "7" in kind  # v7x: 2 TensorCores per chip, 64 MiB VMEM per TC
    if is_v7:
        cap = min(cap, 64 << 20)

    # Request at most ~75% of physical VMEM, leaving compiler-scratch headroom.
    return (cap * 3) // 4, is_v7


def _hypernet_kernel(h_ref, w2_ref, b2_ref, out_ref):
    """One column tile of the weight-generator second layer.

    h_ref  : (1, H)     bf16, resident hidden activation
    w2_ref : (H, TILE)  bf16, streamed column tile of w2
    b2_ref : (1, TILE)  bf16, streamed column tile of b2
    out_ref: (1, TILE)  f32,  generated weight columns (flat row-major (I, O))
    """
    acc = jnp.dot(h_ref[...], w2_ref[...], preferred_element_type=jnp.float32)
    out_ref[...] = acc + b2_ref[...].astype(jnp.float32)


def prepare_hypernet_params(params, input_dim, output_dim, *, max_tile=None):
    """One-time cast / pad of the parameters + VMEM-budget-aware tile choice."""
    H = params["w1"].shape[1]
    N = input_dim * output_dim

    vmem_cap, is_v7 = _vmem_budget_and_cores()

    # Exact double-buffered per-column footprint of the streamed tiles.
    per_col = 2 * (H * 2) + 2 * 2 + 2 * 4       # w2(bf16) + b2(bf16) + out(f32)
    resident = 2 * H * 2 + (64 << 10)           # resident h (+ slack)
    budget_cols = max((vmem_cap - (2 << 20) - resident) // per_col, 128)
    tile_max = max(128, _round_down(budget_cols, 128))
    if max_tile is not None:
        tile_max = max(128, min(tile_max, _round_down(max_tile, 128)))

    # Balance tiles so padding is < 128 columns per tile.
    num_tiles = _cdiv(N, tile_max)
    tile = _round_up(_cdiv(N, num_tiles), 128)
    n_pad = num_tiles * tile

    w2 = params["w2"].astype(jnp.bfloat16)
    b2 = params["b2"].astype(jnp.bfloat16)
    pad = n_pad - N
    if pad:
        w2 = jnp.pad(w2, ((0, 0), (0, pad)))
        b2 = jnp.pad(b2, ((0, 0), (0, pad)))

    # Exact VMEM need (no double counting) + 2 MiB headroom, clamped to budget.
    vmem_needed = (2 * H * tile * 2      # w2 tile, bf16, double-buffered
                   + 2 * tile * 2        # b2 tile, bf16, double-buffered
                   + 2 * tile * 4        # out tile, f32, double-buffered
                   + 2 * H * 2)          # resident h
    vmem_limit = int(min(max(vmem_needed + (2 << 20), 8 << 20), vmem_cap))

    return {
        "w1": params["w1"].astype(jnp.float32),
        "b1": params["b1"].astype(jnp.float32),
        "wb1": params["wb1"].astype(jnp.float32),
        "bb1": params["bb1"].astype(jnp.float32),
        "wb2": params["wb2"].astype(jnp.float32),
        "bb2": params["bb2"].astype(jnp.float32),
        "w2": w2,                          # (H, n_pad) bf16  -- the streamed slab
        "b2": b2,                          # (1, n_pad) bf16
        "hidden_dim": H,
        "tile": int(tile),
        "n_pad": int(n_pad),
        "n_weight": N,
        "input_dim": input_dim,
        "output_dim": output_dim,
        "vmem_limit": vmem_limit,
        "dim_sem": (pltpu.CORE_PARALLEL,) if is_v7 else ("parallel",),
    }


def adapter_hypernet_forward(task_embedding, fused):
    """Returns (weight, bias): weight (input_dim, output_dim), bias (input_dim,)."""
    H = fused["hidden_dim"]
    tile = fused["tile"]
    n_pad = fused["n_pad"]
    N = fused["n_weight"]
    I = fused["input_dim"]
    O = fused["output_dim"]

    te = task_embedding.reshape(-1)[None, :].astype(jnp.float32)      # (1, T)

    # Tiny first layer of the weight generator (hoisted out of the kernel).
    h_w = (te @ fused["w1"] + fused["b1"]).astype(jnp.bfloat16)       # (1, H)

    # The whole bias generator (T -> H -> I) is tiny: keep it in plain f32 JAX.
    h_b = te @ fused["wb1"] + fused["bb1"]                            # (1, H)
    bias = (h_b @ fused["wb2"] + fused["bb2"]).reshape(-1)            # (I,)

    cost = pl.CostEstimate(
        flops=2 * H * n_pad + n_pad,
        transcendentals=0,
        bytes_accessed=(H * n_pad * 2     # w2 (bf16)
                        + n_pad * 2       # b2 (bf16)
                        + n_pad * 4       # output (f32)
                        + H * 2),         # h
    )

    def _call(dim_sem):
        return pl.pallas_call(
            _hypernet_kernel,
            grid=(n_pad // tile,),
            in_specs=[
                pl.BlockSpec((1, H), lambda i: (0, 0)),       # h: resident
                pl.BlockSpec((H, tile), lambda i: (0, i)),    # w2: streamed cols
                pl.BlockSpec((1, tile), lambda i: (0, i)),    # b2: streamed cols
            ],
            out_specs=pl.BlockSpec((1, tile), lambda i: (0, i)),
            out_shape=jax.ShapeDtypeStruct((1, n_pad), jnp.float32),
            compiler_params=pltpu.CompilerParams(
                dimension_semantics=dim_sem,
                vmem_limit_bytes=fused["vmem_limit"],
            ),
            cost_estimate=cost,
        )(h_w, fused["w2"], fused["b2"])

    dim_sem = fused["dim_sem"]
    if dim_sem == ("parallel",):
        out = _call(dim_sem)
    else:
        try:
            out = jax.block_until_ready(_call(dim_sem))
        except Exception:
            # Fallback if CORE_PARALLEL is rejected on this chip / toolchain.
            out = _call(("parallel",))

    # Flat columns -> (I, O).  n_pad == N whenever N divides into the tiles, so
    # the slice is usually a no-op; the reshape is a small wrapper-side copy
    # (~2/H of the streamed bytes).
    weight = out[0, :N].reshape(I, O)
    return weight, bias


def init_params(key, task_embedding_dim, hidden_dim, input_dim, output_dim):
    """Deterministic synthetic init for the two-layer hyper-net (default branch)."""
    N = input_dim * output_dim
    ks = jax.random.split(key, 8)
    scale = 0.02

    def nrm(k, shape, dtype=jnp.float32):
        return (scale * jax.random.normal(k, shape, jnp.float32)).astype(dtype)

    return {
        # weight_generator: Linear(T -> H), Linear(H -> I*O); weights stored (in, out)
        "w1":  nrm(ks[0], (task_embedding_dim, hidden_dim)),
        "b1":  nrm(ks[1], (1, hidden_dim)),
        "w2":  nrm(ks[2], (hidden_dim, N), jnp.bfloat16),   # big slab, stored bf16
        "b2":  nrm(ks[3], (1, N)),
        # bias_generator: Linear(T -> H), Linear(H -> I) — tiny, kept f32
        "wb1": nrm(ks[4], (task_embedding_dim, hidden_dim)),
        "bb1": nrm(ks[5], (1, hidden_dim)),
        "wb2": nrm(ks[6], (hidden_dim, input_dim)),
        "bb2": nrm(ks[7], (1, input_dim)),
    }


def reference_forward(task_embedding, params, input_dim, output_dim):
    """Plain-JAX reference of the PyTorch forward, with the same bf16 storage
    of (h_w, w2, b2) as the kernel; the bias-generator path is full f32."""
    te = task_embedding.reshape(-1)[None, :].astype(jnp.float32)

    h_w = te @ params["w1"].astype(jnp.float32) + params["b1"].astype(jnp.float32)
    hw = h_w.astype(jnp.bfloat16).astype(jnp.float32)
    w2 = params["w2"].astype(jnp.bfloat16).astype(jnp.float32)
    b2 = params["b2"].astype(jnp.bfloat16).astype(jnp.float32)
    weight = (hw @ w2 + b2).reshape(input_dim, output_dim)

    h_b = te @ params["wb1"].astype(jnp.float32) + params["bb1"].astype(jnp.float32)
    bias = (h_b @ params["wb2"].astype(jnp.float32)
            + params["bb2"].astype(jnp.float32)).reshape(-1)
    return weight, bias


if __name__ == "__main__":
    # (task_embedding_dim, hidden_dim, input_dim, output_dim, max_tile)
    #  - first config forces a small tile to exercise the multi-tile grid path
    #  - the others use the automatic VMEM-budget tile selection
    configs = [
        (32, 64, 16, 64, 512),
        (32, 64, 8, 16, None),
        (64, 128, 32, 512, None),
    ]

    key = jax.random.PRNGKey(0)
    for (T, H, I, O, max_tile) in configs:
        key, k_param, k_te = jax.random.split(key, 3)
        params = init_params(k_param, T, H, I, O)
        task_embedding = jax.random.normal(k_te, (T,), jnp.float32)

        fused = prepare_hypernet_params(params, I, O, max_tile=max_tile)
        weight, bias = adapter_hypernet_forward(task_embedding, fused)
        weight, bias = jax.block_until_ready((weight, bias))

        w_ref, b_ref = reference_forward(task_embedding, params, I, O)
        assert weight.shape == (I, O)
        assert bias.shape == (I,)
        assert jnp.allclose(weight, w_ref, atol=2e-4, rtol=2e-3), (
            float(jnp.max(jnp.abs(weight - w_ref))))
        assert jnp.allclose(bias, b_ref, atol=2e-4, rtol=2e-3), (
            float(jnp.max(jnp.abs(bias - b_ref))))

    print("KERNEL_OK")
</pallas_src>

<mosaic_0001>
module attributes {stable_mosaic.version = 11 : i64} {
  func.func @_hypernet_kernel(%arg0: i32, %arg1: memref<1x64xbf16, #tpu.memory_space<vmem>>, %arg2: memref<64x512xbf16, #tpu.memory_space<vmem>>, %arg3: memref<1x512xbf16, #tpu.memory_space<vmem>>, %arg4: memref<1x512xf32, #tpu.memory_space<vmem>>) attributes {dimension_semantics = [#tpu.dimension_semantics<parallel>], iteration_bounds = array<i64: 2>, scalar_prefetch = 0 : i64, scratch_operands = 0 : i64, tpu.core_type = #tpu.core_type<tc>, window_params = [{pipeline_mode = #tpu.pipeline_mode<synchronous>, transform_indices = @transform_0, window_bounds = array<i64: 1, 64>}, {transform_indices = @transform_1, window_bounds = array<i64: 64, 512>}, {transform_indices = @transform_2, window_bounds = array<i64: 1, 512>}, {transform_indices = @transform_3, window_bounds = array<i64: 1, 512>}]} {
    %c0 = arith.constant 0 : index
    %c0_0 = arith.constant 0 : index
    %0 = vector.load %arg1[%c0, %c0_0] : memref<1x64xbf16, #tpu.memory_space<vmem>>, vector<1x64xbf16>
    %c0_1 = arith.constant 0 : index
    %c0_2 = arith.constant 0 : index
    %1 = vector.load %arg2[%c0_1, %c0_2] : memref<64x512xbf16, #tpu.memory_space<vmem>>, vector<64x512xbf16>
    %cst = arith.constant dense<0.000000e+00> : vector<1x512xf32>
    %2 = tpu.matmul %0, %1, %cst {dimension_numbers = #tpu.dot_dimension_numbers<[1], [0], [0], [1], [0, 0, 1, 1], [], []>} : vector<1x64xbf16>, vector<64x512xbf16>, vector<1x512xf32> -> vector<1x512xf32>
    %c0_3 = arith.constant 0 : index
    %c0_4 = arith.constant 0 : index
    %3 = vector.load %arg3[%c0_3, %c0_4] : memref<1x512xbf16, #tpu.memory_space<vmem>>, vector<1x512xbf16>
    %4 = arith.extf %3 : vector<1x512xbf16> to vector<1x512xf32>
    %5 = arith.addf %2, %4 : vector<1x512xf32>
    %c0_5 = arith.constant 0 : index
    %c0_6 = arith.constant 0 : index
    %6 = vector.load %arg4[%c0_5, %c0_6] : memref<1x512xf32, #tpu.memory_space<vmem>>, vector<1x512xf32>
    tpu.vector_store %arg4[%c0_5, %c0_6], %5 {strides = array<i32>} : memref<1x512xf32, #tpu.memory_space<vmem>>, vector<1x512xf32>,
    return
  }
  func.func @transform_0(%arg0: i32) -> (i32, i32) {
    %c0_i32 = arith.constant 0 : i32
    %c0_i32_0 = arith.constant 0 : i32
    %c0_i32_1 = arith.constant 0 : i32
    return %c0_i32, %c0_i32_0 : i32, i32
  }
  func.func @transform_1(%arg0: i32) -> (i32, i32) {
    %c0_i32 = arith.constant 0 : i32
    %c0_i32_0 = arith.constant 0 : i32
    return %c0_i32, %arg0 : i32, i32
  }
  func.func @transform_2(%arg0: i32) -> (i32, i32) {
    %c0_i32 = arith.constant 0 : i32
    %c0_i32_0 = arith.constant 0 : i32
    return %c0_i32, %arg0 : i32, i32
  }
  func.func @transform_3(%arg0: i32) -> (i32, i32) {
    %c0_i32 = arith.constant 0 : i32
    %c0_i32_0 = arith.constant 0 : i32
    return %c0_i32, %arg0 : i32, i32
  }
}

</mosaic_0001>

<llo_original>
// kernel: tpu_custom_call.1
$region0: #{tpu_custom_call.1}
  #allocation0 [shape = 'u32[]', space=smem, size = 0x4, offset = 0x4, fixed_abs, tag = 'smem constant byte address 0x4 - core index']
  #allocation1 [shape = 'u32[72,128]{1,0:T(1,128)}', space=vmem, size = 0x9000, scoped, tag = 'internal scratch']
  %s0 = inlined_call_operand.hbm [shape: bf16[1,64], index: 0, kind: input, shape index: {}]
  %s1 = inlined_call_operand.hbm [shape: bf16[64,1024], index: 1, kind: input, shape index: {}]
  %s2 = inlined_call_operand.hbm [shape: bf16[1,1024], index: 2, kind: input, shape index: {}]
  %s3 = inlined_call_operand.hbm [shape: f32[1,1024], index: 3, kind: output, shape index: {}]
  %s4 = sld [smem:[#allocation0]]
  $region57: #{tpu_custom_call.1} parent=0
    _
  %s6 = ssub.s32 1, %s4
  %s7 = scalar_select 0, %s6, %s4
  $region1: #{tpu_custom_call.1} parent=0
    #allocation2 [shape = 'u8[512]{0}', space=vmem, size = 0x400, scoped, tag = 'input window, operand 0, single buffered']
    #allocation3 [shape = 's32[2]{0}', space=sflag, size = 0x8, scoped, tag = 'scoped memory for tpu_custom_call.1']
    #allocation4 [shape = 's32[2]{0}', space=sflag, size = 0x8, scoped, tag = 'scoped memory for tpu_custom_call.1']
    #allocation5 [shape = 'u8[131072]{0}', space=vmem, size = 0x20000, scoped, tag = 'input window, operand 1']
    #allocation6 [shape = 's32[2]{0}', space=sflag, size = 0x8, scoped, tag = 'scoped memory for tpu_custom_call.1']
    #allocation7 [shape = 'u8[4096]{0}', space=vmem, size = 0x1000, scoped, tag = 'input window, operand 2']
    #allocation8 [shape = 'u8[4096]{0}', space=vmem, size = 0x1000, scoped, tag = 'output window, operand 0']
    %8 = vsyncpa [#allocation3], 0
    %9 = vsyncpa [#allocation6], 0
    %s10 = scalar_lea.sflag [#allocation6], 1
    %11 = vsyncpa %s10, 0
    %12 = vsyncpa [#allocation4], 0
    %s13 = scalar_lea.sflag [#allocation4], 1
    %14 = vsyncpa %s13, 0
    loop: start=0, step=1, limit=4
    $region2: #{tpu_custom_call.1} parent=1 // loop_pre_header
      _
    $region3: #{tpu_custom_call.1} parent=1 // loop_header
      %s16 = sphi 0, %s20
      %p17 = scmp.ge.s32.totalorder %s16, 4
      %s24 = sphi 0, %s24
      %s26 = sphi 0, %s24
      %s27 = sphi 0, %s26
      %s41 = sphi 0, %s27
      %s47 = sphi 0, %s49
      %s50 = sphi 0, %s47
      %s51 = sphi 0, %s50
      %s67 = sphi 0, %s51
      %s73 = sphi 0, %s75
      %s76 = sphi 0, %s73
      %s77 = sphi 0, %s76
      %s93 = sphi 0, %s77
      %s99 = sphi 0, %s101
      %s102 = sphi 0, %s99
      %s103 = sphi 0, %s102
      %s119 = sphi 0, %s103
    $region4: #{tpu_custom_call.1} parent=1 // loop_header_branch
      %19 = sbr.rel (%p17) target = $region8
    $region5: #{tpu_custom_call.1} parent=1 // loop_body
      %s21 = ssub.s32 %s16, 1
      %s22 = ssub.s32 %s16, 2
      %s23 = sadd.s32 %s16, 1
      %s25 = sadd.s32 %s24, 1
      %p28 = scmp.eq.s32.totalorder %s16, 1
      %p29 = scmp.ne.s32.totalorder %s24, %s26
      %p30 = scmp.eq.s32.totalorder %s16, 0
      %p31 = por %p29, %p30
      %p32 = scmp.ne.s32.totalorder %s24, %s26
      %p33 = scmp.eq.s32.totalorder %s21, 1
      %p34 = por %p32, %p33
      %p35 = scmp.ne.s32.totalorder %s26, %s27
      %p36 = scmp.eq.s32.totalorder %s21, 0
      %p37 = por %p35, %p36
      %p38 = scmp.ne.s32.totalorder %s26, %s27
      %p39 = scmp.eq.s32.totalorder %s22, 1
      %p40 = por %p38, %p39
      %p42 = scmp.ne.s32.totalorder %s27, %s41
      %p43 = scmp.eq.s32.totalorder %s22, 0
      %p44 = por %p42, %p43
      %s45 = ssub.s32 %s16, %s23
      %p46 = scmp.eq.s32.totalorder %s45, 0
      %s48 = sadd.s32 %s47, 1
      %s49 = scalar_select %p46, %s47, %s48
      %p52 = pneg %p46
      %p53 = scmp.eq.s32.totalorder %s16, 1
      %p54 = por %p52, %p53
      %p55 = scmp.ne.s32.totalorder %s47, %s50
      %p56 = scmp.eq.s32.totalorder %s16, 0
      %p57 = por %p55, %p56
      %p58 = scmp.ne.s32.totalorder %s47, %s50
      %p59 = scmp.eq.s32.totalorder %s21, 1
      %p60 = por %p58, %p59
      %p61 = scmp.ne.s32.totalorder %s50, %s51
      %p62 = scmp.eq.s32.totalorder %s21, 0
      %p63 = por %p61, %p62
      %p64 = scmp.ne.s32.totalorder %s50, %s51
      %p65 = scmp.eq.s32.totalorder %s22, 1
      %p66 = por %p64, %p65
      %p68 = scmp.ne.s32.totalorder %s51, %s67
      %p69 = scmp.eq.s32.totalorder %s22, 0
      %p70 = por %p68, %p69
      %s71 = ssub.s32 %s16, %s23
      %p72 = scmp.eq.s32.totalorder %s71, 0
      %s74 = sadd.s32 %s73, 1
      %s75 = scalar_select %p72, %s73, %s74
      %p78 = pneg %p72
      %p79 = scmp.eq.s32.totalorder %s16, 1
      %p80 = por %p78, %p79
      %p81 = scmp.ne.s32.totalorder %s73, %s76
      %p82 = scmp.eq.s32.totalorder %s16, 0
      %p83 = por %p81, %p82
      %p84 = scmp.ne.s32.totalorder %s73, %s76
      %p85 = scmp.eq.s32.totalorder %s21, 1
      %p86 = por %p84, %p85
      %p87 = scmp.ne.s32.totalorder %s76, %s77
      %p88 = scmp.eq.s32.totalorder %s21, 0
      %p89 = por %p87, %p88
      %p90 = scmp.ne.s32.totalorder %s76, %s77
      %p91 = scmp.eq.s32.totalorder %s22, 1
      %p92 = por %p90, %p91
      %p94 = scmp.ne.s32.totalorder %s77, %s93
      %p95 = scmp.eq.s32.totalorder %s22, 0
      %p96 = por %p94, %p95
      %s97 = ssub.s32 %s16, %s23
      %p98 = scmp.eq.s32.totalorder %s97, 0
      %s100 = sadd.s32 %s99, 1
      %s101 = scalar_select %p98, %s99, %s100
      %p104 = pneg %p98
      %p105 = scmp.eq.s32.totalorder %s16, 1
      %p106 = por %p104, %p105
      %p107 = scmp.ne.s32.totalorder %s99, %s102
      %p108 = scmp.eq.s32.totalorder %s16, 0
      %p109 = por %p107, %p108
      %p110 = scmp.ne.s32.totalorder %s99, %s102
      %p111 = scmp.eq.s32.totalorder %s21, 1
      %p112 = por %p110, %p111
      %p113 = scmp.ne.s32.totalorder %s102, %s103
      %p114 = scmp.eq.s32.totalorder %s21, 0
      %p115 = por %p113, %p114
      %p116 = scmp.ne.s32.totalorder %s102, %s103
      %p117 = scmp.eq.s32.totalorder %s22, 1
      %p118 = por %p116, %p117
      %p120 = scmp.ne.s32.totalorder %s103, %s119
      %p121 = scmp.eq.s32.totalorder %s22, 0
      %p122 = por %p120, %p121
      %p123 = scmp.le.s32.totalorder 1, %s16
      %p124 = scmp.lt.s32.totalorder %s16, 3
      %p125 = pnand %p123, %p124
      %p126 = pneg %p125
      // Predicated region
      $region9: #{tpu_custom_call.1} parent=5 // pred_check
        _
      $region10: #{tpu_custom_call.1} parent=5 // pred_check_branch
        %128 = sbr.rel (%p125) target = $region12
      $region11: #{tpu_custom_call.1} parent=5 // pred_region
        %s129 = ssub.s32 %s16, 1
        // Predicated region
        $region13: #{tpu_custom_call.1} parent=11 // pred_check
          %p130 = pneg %p37
        $region14: #{tpu_custom_call.1} parent=11 // pred_check_branch
          %132 = sbr.rel (%p130) target = $region16
        $region15: #{tpu_custom_call.1} parent=11 // pred_region
          %134 = vsyncadd [#allocation3], 0
          %s136 = sshll.u32 %s0, 4
          %s137 = int_to_ptr.hbm [resolvable:$true] %s136
          %s138 = sshll.u32 [#allocation2], 4
          %s139 = int_to_ptr.vmem [resolvable:$true] %s138
          %141 = dma.hbm_to_vmem [thread:$0]  %s137, 16, %s139, [#allocation3]
        $region16: #{tpu_custom_call.1} parent=11 // pred_fallthru
          _
      $region12: #{tpu_custom_call.1} parent=5 // pred_fallthru
        _
      %p142 = scmp.lt.s32.totalorder %s16, 2
      // Predicated region
      $region17: #{tpu_custom_call.1} parent=5 // pred_check
        %p143 = pneg %p142
      $region18: #{tpu_custom_call.1} parent=5 // pred_check_branch
        %145 = sbr.rel (%p143) target = $region20
      $region19: #{tpu_custom_call.1} parent=5 // pred_region
        // Predicated region
        $region21: #{tpu_custom_call.1} parent=19 // pred_check
          %p146 = pneg %p57
        $region22: #{tpu_custom_call.1} parent=19 // pred_check_branch
          %148 = sbr.rel (%p146) target = $region24
        $region23: #{tpu_custom_call.1} parent=19 // pred_region
          %s149 = sand.u32 %s16, 1
          %s150 = scalar_lea.sflag [#allocation6], %s149
          %s151 = sand.u32 %s47, 1
          %s152 = smul.addr %s151, 128
          %s153 = scalar_lea.vmem [#allocation5], %s152
          %s154 = smul.u32 4, %s16
          %156 = vsyncadd %s150, 0
          %s157 = smul.addr %s154, 4
          %s158 = scalar_lea.hbm %s1, %s157
          %s159 = sshll.u32 %s158, 4
          %s160 = int_to_ptr.hbm [resolvable:$true] %s159
          %s161 = sshll.u32 %s153, 4
          %s162 = int_to_ptr.vmem [resolvable:$true] %s161
          %167 = dma.hbm_to_vmem [thread:$0]  %s160, 2048, %s162, %s150, 512, 256, 16
        $region24: #{tpu_custom_call.1} parent=19 // pred_fallthru
          _
        // Predicated region
        $region25: #{tpu_custom_call.1} parent=19 // pred_check
          %p168 = pneg %p83
        $region26: #{tpu_custom_call.1} parent=19 // pred_check_branch
          %170 = sbr.rel (%p168) target = $region28
        $region27: #{tpu_custom_call.1} parent=19 // pred_region
          %s171 = sand.u32 %s16, 1
          %s172 = scalar_lea.sflag [#allocation6], %s171
          %s173 = sand.u32 %s73, 1
          %s174 = smul.addr %s173, 4
          %s175 = scalar_lea.vmem [#allocation7], %s174
          %s176 = smul.u32 4, %s16
          %178 = vsyncadd %s172, 0
          %s179 = scalar_lea.hbm %s2, %s176
          %s181 = sshll.u32 %s179, 4
          %s182 = int_to_ptr.hbm [resolvable:$true] %s181
          %s183 = sshll.u32 %s175, 4
          %s184 = int_to_ptr.vmem [resolvable:$true] %s183
          %186 = dma.hbm_to_vmem [thread:$0]  %s182, 64, %s184, %s172
        $region28: #{tpu_custom_call.1} parent=19 // pred_fallthru
          _
      $region20: #{tpu_custom_call.1} parent=5 // pred_fallthru
        _
      %p187 = scmp.le.s32.totalorder 1, %s16
      %p188 = scmp.lt.s32.totalorder %s16, 3
      %p189 = pnand %p187, %p188
      %p190 = pneg %p189
      // Predicated region
      $region29: #{tpu_custom_call.1} parent=5 // pred_check
        _
      $region30: #{tpu_custom_call.1} parent=5 // pred_check_branch
        %192 = sbr.rel (%p189) target = $region32
      $region31: #{tpu_custom_call.1} parent=5 // pred_region
        %s193 = ssub.s32 %s16, 1
        // Predicated region
        $region33: #{tpu_custom_call.1} parent=31 // pred_check
          %p194 = pneg %p37
        $region34: #{tpu_custom_call.1} parent=31 // pred_check_branch
          %196 = sbr.rel (%p194) target = $region36
        $region35: #{tpu_custom_call.1} parent=31 // pred_region
          %198 = dma.done [#allocation3], 16
        $region36: #{tpu_custom_call.1} parent=31 // pred_fallthru
          _
        %s199 = sand.u32 %s21, 1
        %s200 = scalar_lea.sflag [#allocation6], %s199
        %s201 = sand.u32 %s50, 1
        %s202 = smul.addr %s201, 128
        %s203 = scalar_lea.vmem [#allocation5], %s202
        // Predicated region
        $region37: #{tpu_custom_call.1} parent=31 // pred_check
          %p204 = pneg %p63
        $region38: #{tpu_custom_call.1} parent=31 // pred_check_branch
          %206 = sbr.rel (%p204) target = $region40
        $region39: #{tpu_custom_call.1} parent=31 // pred_region
          %208 = dma.done %s200, 2048
        $region40: #{tpu_custom_call.1} parent=31 // pred_fallthru
          _
        %s209 = sand.u32 %s21, 1
        %s210 = scalar_lea.sflag [#allocation6], %s209
        %s211 = sand.u32 %s76, 1
        %s212 = smul.addr %s211, 4
        %s213 = scalar_lea.vmem [#allocation7], %s212
        // Predicated region
        $region41: #{tpu_custom_call.1} parent=31 // pred_check
          %p214 = pneg %p89
        $region42: #{tpu_custom_call.1} parent=31 // pred_check_branch
          %216 = sbr.rel (%p214) target = $region44
        $region43: #{tpu_custom_call.1} parent=31 // pred_region
          %218 = dma.done %s210, 64
        $region44: #{tpu_custom_call.1} parent=31 // pred_fallthru
          _
        %p219 = pneg %p37
        %p220 = pneg %p34
        %s221 = sand.u32 %s21, 1
        %s222 = scalar_lea.sflag [#allocation6], %s221
        %s223 = sand.u32 %s50, 1
        %s224 = smul.addr %s223, 128
        %s225 = scalar_lea.vmem [#allocation5], %s224
        %p226 = pneg %p63
        %p227 = pneg %p60
        %s228 = sand.u32 %s21, 1
        %s229 = scalar_lea.sflag [#allocation6], %s228
        %s230 = sand.u32 %s76, 1
        %s231 = smul.addr %s230, 4
        %s232 = scalar_lea.vmem [#allocation7], %s231
        %p233 = pneg %p89
        %p234 = pneg %p86
        %p235 = pneg %p115
        %p236 = pneg %p112
        %s237 = sand.u32 %s102, 1
        %s238 = scalar_lea.sflag [#allocation4], %s237
        %s239 = sand.u32 %s102, 1
        %s240 = smul.addr %s239, 4
        %s241 = scalar_lea.vmem [#allocation8], %s240
        %s242 = smul.u32 4, %s21
        %s243 = smul.u32 4, %s21
        %s244 = smul.u32 4, %s21
        %v246 = vld [vmem:[#allocation2] sm:$0x1]
        %v247 = vld [vmem:[%s203] sm:$0xff]
        %v248 = vld [vmem:[%s203 + $0x8] sm:$0xff]
        %v249 = vld [vmem:[%s203 + $0x10] sm:$0xff]
        %v250 = vld [vmem:[%s203 + $0x18] sm:$0xff]
        %v251 = vld [vmem:[%s203 + $0x20] sm:$0xff]
        %v252 = vld [vmem:[%s203 + $0x28] sm:$0xff]
        %v253 = vld [vmem:[%s203 + $0x30] sm:$0xff]
        %v254 = vld [vmem:[%s203 + $0x38] sm:$0xff]
        %v255 = vld [vmem:[%s203 + $0x40] sm:$0xff]
        %v256 = vld [vmem:[%s203 + $0x48] sm:$0xff]
        %v257 = vld [vmem:[%s203 + $0x50] sm:$0xff]
        %v258 = vld [vmem:[%s203 + $0x58] sm:$0xff]
        %v259 = vld [vmem:[%s203 + $0x60] sm:$0xff]
        %v260 = vld [vmem:[%s203 + $0x68] sm:$0xff]
        %v261 = vld [vmem:[%s203 + $0x70] sm:$0xff]
        %v262 = vld [vmem:[%s203 + $0x78] sm:$0xff]
        %v263 = vld [vmem:[%s213] sm:$0xf]
        %v264 = vunpack.c.l.bf16 %v263
        %v281 = vunpack.c.l.b16 %v247
        %v282 = vunpack.c.h.b16 %v247
        %v283 = vunpack.c.l.b16 %v248
        %v284 = vunpack.c.h.b16 %v248
        %v285 = vunpack.c.l.b16 %v249
        %v286 = vunpack.c.h.b16 %v249
        %v287 = vunpack.c.l.b16 %v250
        %v288 = vunpack.c.h.b16 %v250
        %v289 = vunpack.c.l.b16 %v251
        %v290 = vunpack.c.h.b16 %v251
        %v291 = vunpack.c.l.b16 %v252
        %v292 = vunpack.c.h.b16 %v252
        %v293 = vunpack.c.l.b16 %v253
        %v294 = vunpack.c.h.b16 %v253
        %v295 = vunpack.c.l.b16 %v254
        %v296 = vunpack.c.h.b16 %v254
        %v297 = vunpack.c.l.b16 %v255
        %v298 = vunpack.c.h.b16 %v255
        %v299 = vunpack.c.l.b16 %v256
        %v300 = vunpack.c.h.b16 %v256
        %v301 = vunpack.c.l.b16 %v257
        %v302 = vunpack.c.h.b16 %v257
        %v303 = vunpack.c.l.b16 %v258
        %v304 = vunpack.c.h.b16 %v258
        %v305 = vunpack.c.l.b16 %v259
        %v306 = vunpack.c.h.b16 %v259
        %v307 = vunpack.c.l.b16 %v260
        %v308 = vunpack.c.h.b16 %v260
        %v309 = vunpack.c.l.b16 %v261
        %v310 = vunpack.c.h.b16 %v261
        %v311 = vunpack.c.l.b16 %v262
        %v312 = vunpack.c.h.b16 %v262
        %v313 = vpack.c.b16 %v285, %v281
        %v314 = vpack.c.b16 %v286, %v282
        %v315 = vpack.c.b16 %v287, %v283
        %v316 = vpack.c.b16 %v288, %v284
        %v317 = vpack.c.b16 %v293, %v289
        %v318 = vpack.c.b16 %v294, %v290
        %v319 = vpack.c.b16 %v295, %v291
        %v320 = vpack.c.b16 %v296, %v292
        %v321 = vpack.c.b16 %v301, %v297
        %v322 = vpack.c.b16 %v302, %v298
        %v323 = vpack.c.b16 %v303, %v299
        %v324 = vpack.c.b16 %v304, %v300
        %v325 = vpack.c.b16 %v309, %v305
        %v326 = vpack.c.b16 %v310, %v306
        %v327 = vpack.c.b16 %v311, %v307
        %v328 = vpack.c.b16 %v312, %v308
        %v346 = vperm.slane %v264, 0
        %v347 = vperm.slane %v264, 2
        %v348 = vperm.slane %v264, 4
        %v349 = vperm.slane %v264, 6
        %vm354 = vcmask 523264
        %v356 = vsel %vm354, %v246, 0
        %358 = vmatpush.bf16.msra.mxu0 0
        %359 = vmatpush.bf16.msra.mxu0 0
        %360 = vmatpush.bf16.msra.mxu0 0
        %361 = vmatpush.bf16.msra.mxu0 0
        %362 = vmatpush.bf16.msra.mxu0 %v325
        %363 = vmatpush.bf16.msra.mxu0 %v321
        %364 = vmatpush.bf16.msra.mxu0 %v317
        %365 = vmatpush.bf16.msra.mxu0 %v313
        %366 = vmatmul.bf16.gmra.mxu0 %v356
        %v367 = vpop.f32.mrf.mxu0
        %v368 = vadd.f32 %v346, %v367
        %v369 = vpop.f32.mrf.mxu0
        %370 = vdwg.mxu0
        %371 = vmatpush.bf16.msra.mxu0 0
        %372 = vmatpush.bf16.msra.mxu0 0
        %373 = vmatpush.bf16.msra.mxu0 0
        %374 = vmatpush.bf16.msra.mxu0 0
        %375 = vmatpush.bf16.msra.mxu0 %v326
        %376 = vmatpush.bf16.msra.mxu0 %v322
        %377 = vmatpush.bf16.msra.mxu0 %v318
        %378 = vmatpush.bf16.msra.mxu0 %v314
        %379 = vmatmul.bf16.gmra.mxu0 %v356
        %v380 = vpop.f32.mrf.mxu0
        %v381 = vadd.f32 %v347, %v380
        %v382 = vpop.f32.mrf.mxu0
        %383 = vdwg.mxu0
        %384 = vmatpush.bf16.msra.mxu0 0
        %385 = vmatpush.bf16.msra.mxu0 0
        %386 = vmatpush.bf16.msra.mxu0 0
        %387 = vmatpush.bf16.msra.mxu0 0
        %388 = vmatpush.bf16.msra.mxu0 %v327
        %389 = vmatpush.bf16.msra.mxu0 %v323
        %390 = vmatpush.bf16.msra.mxu0 %v319
        %391 = vmatpush.bf16.msra.mxu0 %v315
        %392 = vmatmul.bf16.gmra.mxu0 %v356
        %v393 = vpop.f32.mrf.mxu0
        %v394 = vadd.f32 %v348, %v393
        %v395 = vpop.f32.mrf.mxu0
        %396 = vdwg.mxu0
        %397 = vmatpush.bf16.msra.mxu0 0
        %398 = vmatpush.bf16.msra.mxu0 0
        %399 = vmatpush.bf16.msra.mxu0 0
        %400 = vmatpush.bf16.msra.mxu0 0
        %401 = vmatpush.bf16.msra.mxu0 %v328
        %402 = vmatpush.bf16.msra.mxu0 %v324
        %403 = vmatpush.bf16.msra.mxu0 %v320
        %404 = vmatpush.bf16.msra.mxu0 %v316
        %405 = vmatmul.bf16.gmra.mxu0 %v356
        %v406 = vpop.f32.mrf.mxu0
        %v407 = vadd.f32 %v349, %v406
        %v408 = vpop.f32.mrf.mxu0
        %409 = vdwg.mxu0
        %v414 = vrot.slane %v381, 7
        %v415 = vrot.slane %v394, 6
        %v416 = vrot.slane %v407, 5
        %vm417 = vcmask 1040384
        %v418 = vsel %vm417, %v368, %v414
        %vm419 = vcmask 1042434
        %v420 = vsel %vm419, %v415, %v416
        %vm421 = vcmask 1041408
        %v422 = vsel %vm421, %v418, %v420
        %v424 = vlaneseq
        %vm425 = vcmp.ge.s32.totalorder %v424, 0
        %vm426 = vcmp.lt.s32.totalorder %v424, 512
        %vm427 = vmand %vm425, %vm426
        %428 = vst.msk [vmem:[%s241] sm:$0xf] %vm427, %v422
        %s429 = sand.u32 %s102, 1
        %s430 = scalar_lea.sflag [#allocation4], %s429
        %s431 = sand.u32 %s102, 1
        %s432 = smul.addr %s431, 4
        %s433 = scalar_lea.vmem [#allocation8], %s432
        // Predicated region
        $region45: #{tpu_custom_call.1} parent=31 // pred_check
          %p434 = pneg %p112
        $region46: #{tpu_custom_call.1} parent=31 // pred_check_branch
          %436 = sbr.rel (%p434) target = $region48
        $region47: #{tpu_custom_call.1} parent=31 // pred_region
          %s437 = smul.u32 4, %s21
          %439 = vsyncadd %s430, 0
          %s440 = scalar_lea.hbm %s3, %s437
          %s442 = sshll.u32 %s433, 4
          %s443 = int_to_ptr.vmem [resolvable:$true] %s442
          %s444 = sshll.u32 %s440, 4
          %s445 = int_to_ptr.hbm [resolvable:$true] %s444
          %447 = dma.vmem_to_hbm [thread:$0]  %s443, 64, %s445, %s430
        $region48: #{tpu_custom_call.1} parent=31 // pred_fallthru
          _
      $region32: #{tpu_custom_call.1} parent=5 // pred_fallthru
        _
      %p448 = scmp.le.s32.totalorder 2, %s16
      // Predicated region
      $region49: #{tpu_custom_call.1} parent=5 // pred_check
        %p449 = pneg %p448
      $region50: #{tpu_custom_call.1} parent=5 // pred_check_branch
        %451 = sbr.rel (%p449) target = $region52
      $region51: #{tpu_custom_call.1} parent=5 // pred_region
        %s452 = ssub.s32 %s16, 2
        // Predicated region
        $region53: #{tpu_custom_call.1} parent=51 // pred_check
          %p453 = pneg %p118
        $region54: #{tpu_custom_call.1} parent=51 // pred_check_branch
          %455 = sbr.rel (%p453) target = $region56
        $region55: #{tpu_custom_call.1} parent=51 // pred_region
          %s456 = sand.u32 %s103, 1
          %s457 = scalar_lea.sflag [#allocation4], %s456
          %s458 = sand.u32 %s103, 1
          %s459 = smul.addr %s458, 4
          %s460 = scalar_lea.vmem [#allocation8], %s459
          %462 = dma.done %s457, 64
        $region56: #{tpu_custom_call.1} parent=51 // pred_fallthru
          _
      $region52: #{tpu_custom_call.1} parent=5 // pred_fallthru
        _
    $region6: #{tpu_custom_call.1} parent=1 // loop_footer
      %s20 = sadd.s32 1, %s16
    $region7: #{tpu_custom_call.1} parent=1 // loop_footer_branch
      %15 = sbr.rel target = $region3
    $region8: #{tpu_custom_call.1} parent=1 // loop_exit
      _
    %463 = vsyncpa [#allocation3], 1
    %s464 = scalar_lea.sflag [#allocation3], 1
    %465 = vsyncpa %s464, 1
    %466 = vsyncpa [#allocation6], 1
    %s467 = scalar_lea.sflag [#allocation6], 1
    %468 = vsyncpa %s467, 1
    %469 = vsyncpa [#allocation4], 1
    %s470 = scalar_lea.sflag [#allocation4], 1
    %471 = vsyncpa %s470, 1

</llo_original>
